<compile_context>
chip_gen: v6e
topology: v6e:2x2x1
jax: 0.10.0
libtpu: 0.0.40
codegen_flags: <defaults>
</compile_context>

<pallas_src>
import jax
import jax.numpy as jnp
from jax.experimental import pallas as pl
from jax.experimental.pallas import tpu as pltpu

# CIFAR-10 statistics (same constants used by normalize() in train_cifar_wa.py).
CIFAR10_MEAN = (0.4914, 0.4822, 0.4465)
CIFAR10_STD = (0.2471, 0.2435, 0.2616)

_LANE = 128      # lane width (last-dim tile)
_SUBLANE = 8     # sublane count (second-to-last-dim tile)
_MAX_TB = 512    # batch tile for large batches (mem-bound sweet spot)


def _round_up(x, m):
    return ((x + m - 1) // m) * m


def _pick_batch_tile(batch):
    """Batch tile: 512 for large B; split medium B into >=2 tiles (v7x 2xTC)."""
    if batch > _MAX_TB:
        return _MAX_TB
    b8 = _round_up(batch, _SUBLANE)
    if b8 >= 2 * _SUBLANE:
        # Two roughly-equal tiles so both TensorCores get work on v7x.
        return _round_up((batch + 1) // 2, _SUBLANE)
    return b8


def _resident_spec(block_shape):
    """Constant-index-map (resident) BlockSpec, single-buffered when supported."""
    index_map = lambda i: (0, 0)
    try:
        return pl.BlockSpec(block_shape, index_map, pipeline_mode=pl.Buffered(1))
    except (TypeError, ValueError):
        # Older jax without pipeline_mode / Buffered(1): fall back gracefully.
        return pl.BlockSpec(block_shape, index_map)


def _linear_kernel(x_ref, w_ref, b_ref, o_ref):
    # x_ref: (TB, D)  bf16 (or f32) batch tile, pipelined across the grid
    # w_ref: (D, Kp)  bf16 folded weights, resident (constant index map)
    # b_ref: (1, Kp)  f32 folded bias, resident
    # o_ref: (TB, Kp) f32 logits tile (lane-dense: Kp is a multiple of 128)
    x = x_ref[...].astype(w_ref.dtype)            # no-op when X is already bf16
    o_ref[...] = (
        jnp.dot(x, w_ref[...], preferred_element_type=jnp.float32)
        + b_ref[...]
    ).astype(o_ref.dtype)


def prepare_norm_linear_params(w, b, spatial_hw, use_bf16=True):
    """One-time (init-time) transform of the linear head.

    Folds the CIFAR per-channel normalization into (w, b) -- assuming NCHW
    flatten order -- and pads the class dimension up to a lane-dense 128.
    Amortized across calls; do NOT call this per forward pass.
    """
    H, W = spatial_hw
    C = len(CIFAR10_MEAN)
    D, K = w.shape
    assert D == C * H * W, "linear head input dim must match flattened NCHW image"

    mean_vec = jnp.repeat(jnp.asarray(CIFAR10_MEAN, jnp.float32), H * W)         # (D,)
    invstd_vec = jnp.repeat(1.0 / jnp.asarray(CIFAR10_STD, jnp.float32), H * W)  # (D,)

    w32 = w.astype(jnp.float32)
    w_fold = w32 * invstd_vec[:, None]                                   # (D, K)
    b_fold = b.astype(jnp.float32) - (mean_vec * invstd_vec) @ w32       # (K,)

    Kp = _round_up(K, _LANE)      # exactly 128 for K=10; never pad wider
    w_pad = jnp.zeros((D, Kp), jnp.float32).at[:, :K].set(w_fold)
    b_pad = jnp.zeros((1, Kp), jnp.float32).at[:, :K].set(b_fold)
    if use_bf16:
        w_pad = w_pad.astype(jnp.bfloat16)
    return w_pad, b_pad, K


def norm_input_model_forward(x_nchw, w_pad, b_pad, num_classes):
    """Forward of NormInputModel: logits = linear_head(normalize(x)).

    `x_nchw` should be delivered in bfloat16 (stored upstream as bf16) for the
    mem-bound fast path; f32 input also works.
    """
    B, C, H, W = x_nchw.shape
    assert C == len(CIFAR10_MEAN), "expects NCHW input with 3 channels"
    D = C * H * W
    Kp = w_pad.shape[1]

    x_flat = x_nchw.reshape(B, D)          # keep caller dtype; no extra HBM pass

    TB = _pick_batch_tile(B)
    n_tiles = pl.cdiv(B, TB)               # ragged last tile masked by Pallas

    x_bytes = jnp.dtype(x_flat.dtype).itemsize
    w_bytes = jnp.dtype(w_pad.dtype).itemsize
    vmem_needed = (
        2 * TB * D * x_bytes               # double-buffered X tiles
        + D * Kp * w_bytes                 # resident W (single-buffered)
        + Kp * 4                           # resident bias
        + 2 * TB * Kp * 4                  # double-buffered output tiles
    )
    vmem_limit = min(max(32 << 20, int(1.5 * vmem_needed) + (4 << 20)), 64 << 20)

    cost = pl.CostEstimate(
        flops=2 * B * D * Kp,
        transcendentals=0,
        bytes_accessed=B * D * x_bytes + D * Kp * w_bytes + B * Kp * 4,
    )

    out = pl.pallas_call(
        _linear_kernel,
        out_shape=jax.ShapeDtypeStruct((B, Kp), jnp.float32),
        grid_spec=pltpu.PrefetchScalarGridSpec(
            num_scalar_prefetch=0,
            grid=(n_tiles,),
            in_specs=[
                pl.BlockSpec((TB, D), lambda i: (i, 0)),   # batch tile, pipelined
                _resident_spec((D, Kp)),                   # resident weights
                _resident_spec((1, Kp)),                   # resident bias
            ],
            out_specs=pl.BlockSpec((TB, Kp), lambda i: (i, 0)),
        ),
        compiler_params=pltpu.CompilerParams(
            dimension_semantics=("parallel",),   # shard batch tiles across TCs
            vmem_limit_bytes=vmem_limit,
        ),
        cost_estimate=cost,
    )(x_flat, w_pad, b_pad)

    return out[:, :num_classes]


def reference_forward(x_nchw, w, b):
    B, C, H, W = x_nchw.shape
    x32 = x_nchw.astype(jnp.float32)
    mean_c = jnp.asarray(CIFAR10_MEAN, jnp.float32).reshape(1, C, 1, 1)
    std_c = jnp.asarray(CIFAR10_STD, jnp.float32).reshape(1, C, 1, 1)
    xn = (x32 - mean_c) / std_c
    return xn.reshape(B, -1) @ w + b


if __name__ == "__main__":
    # Small CIFAR-like shapes: batch=2, channels=3, spatial=16x16, 10 classes.
    B, C, H, W, K = 2, 3, 16, 16, 10
    D = C * H * W

    key = jax.random.PRNGKey(0)
    kx, kw, kb = jax.random.split(key, 3)
    # Activations are stored/delivered as bf16 upstream (init time), so the
    # kernel's dominant HBM stream is already half-width.
    x = jax.random.uniform(kx, (B, C, H, W), dtype=jnp.float32).astype(jnp.bfloat16)

    # TODO(synk): the wrapped `model` in NormInputModel is an arbitrary nn.Module;
    # instantiated here as a deterministic linear classifier head.
    w = jax.random.normal(kw, (D, K), dtype=jnp.float32) * 0.02
    b = jax.random.normal(kb, (K,), dtype=jnp.float32) * 0.02

    # One-time param prep (normalization fold + K padding + bf16 weights).
    w_pad, b_pad, num_classes = prepare_norm_linear_params(
        w, b, (H, W), use_bf16=True
    )

    out = norm_input_model_forward(x, w_pad, b_pad, num_classes)
    out = jax.block_until_ready(out)

    ref = reference_forward(x, w, b)
    assert out.shape == (B, K)
    # bf16 activations + bf16 weights on the MXU -> looser tolerance than f32.
    assert jnp.allclose(out, ref, atol=5e-2, rtol=5e-2), float(
        jnp.max(jnp.abs(out - ref))
    )

    print("KERNEL_OK")
</pallas_src>

<mosaic_0001>
module attributes {stable_mosaic.version = 11 : i64} {
  func.func @_linear_kernel(%arg0: i32, %arg1: memref<8x768xbf16, #tpu.memory_space<vmem>>, %arg2: memref<768x128xbf16, #tpu.memory_space<vmem>>, %arg3: memref<1x128xf32, #tpu.memory_space<vmem>>, %arg4: memref<8x128xf32, #tpu.memory_space<vmem>>) attributes {dimension_semantics = [#tpu.dimension_semantics<parallel>], iteration_bounds = array<i64: 1>, scalar_prefetch = 0 : i64, scratch_operands = 0 : i64, tpu.core_type = #tpu.core_type<tc>, window_params = [{transform_indices = @transform_0, window_bounds = array<i64: 8, 768>}, {pipeline_mode = #tpu.pipeline_mode<synchronous>, transform_indices = @transform_1, window_bounds = array<i64: 768, 128>}, {pipeline_mode = #tpu.pipeline_mode<synchronous>, transform_indices = @transform_2, window_bounds = array<i64: 1, 128>}, {transform_indices = @transform_3, window_bounds = array<i64: 8, 128>}]} {
    %c0 = arith.constant 0 : index
    %c0_0 = arith.constant 0 : index
    %0 = vector.load %arg1[%c0, %c0_0] : memref<8x768xbf16, #tpu.memory_space<vmem>>, vector<8x768xbf16>
    %c0_1 = arith.constant 0 : index
    %c0_2 = arith.constant 0 : index
    %1 = vector.load %arg2[%c0_1, %c0_2] : memref<768x128xbf16, #tpu.memory_space<vmem>>, vector<768x128xbf16>
    %cst = arith.constant dense<0.000000e+00> : vector<8x128xf32>
    %2 = tpu.matmul %0, %1, %cst {dimension_numbers = #tpu.dot_dimension_numbers<[1], [0], [0], [1], [0, 0, 1, 1], [], []>} : vector<8x768xbf16>, vector<768x128xbf16>, vector<8x128xf32> -> vector<8x128xf32>
    %c0_3 = arith.constant 0 : index
    %c0_4 = arith.constant 0 : index
    %3 = vector.load %arg3[%c0_3, %c0_4] : memref<1x128xf32, #tpu.memory_space<vmem>>, vector<1x128xf32>
    %4 = vector.broadcast %3 : vector<1x128xf32> to vector<8x128xf32>
    %5 = arith.addf %2, %4 : vector<8x128xf32>
    %c0_5 = arith.constant 0 : index
    %c0_6 = arith.constant 0 : index
    %6 = vector.load %arg4[%c0_5, %c0_6] : memref<8x128xf32, #tpu.memory_space<vmem>>, vector<8x128xf32>
    tpu.vector_store %arg4[%c0_5, %c0_6], %5 {strides = array<i32>} : memref<8x128xf32, #tpu.memory_space<vmem>>, vector<8x128xf32>,
    return
  }
  func.func @transform_0(%arg0: i32) -> (i32, i32) {
    %c0_i32 = arith.constant 0 : i32
    %c0_i32_0 = arith.constant 0 : i32
    return %arg0, %c0_i32 : i32, i32
  }
  func.func @transform_1(%arg0: i32) -> (i32, i32) {
    %c0_i32 = arith.constant 0 : i32
    %c0_i32_0 = arith.constant 0 : i32
    %c0_i32_1 = arith.constant 0 : i32
    return %c0_i32, %c0_i32_0 : i32, i32
  }
  func.func @transform_2(%arg0: i32) -> (i32, i32) {
    %c0_i32 = arith.constant 0 : i32
    %c0_i32_0 = arith.constant 0 : i32
    %c0_i32_1 = arith.constant 0 : i32
    return %c0_i32, %c0_i32_0 : i32, i32
  }
  func.func @transform_3(%arg0: i32) -> (i32, i32) {
    %c0_i32 = arith.constant 0 : i32
    %c0_i32_0 = arith.constant 0 : i32
    return %arg0, %c0_i32 : i32, i32
  }
}

</mosaic_0001>

<llo_original>
// kernel: tpu_custom_call.1
$region0: #{tpu_custom_call.1}
  #allocation0 [shape = 'u32[]', space=smem, size = 0x4, offset = 0x4, fixed_abs, tag = 'smem constant byte address 0x4 - core index']
  #allocation1 [shape = 'u32[144,128]{1,0:T(1,128)}', space=vmem, size = 0x12000, scoped, tag = 'internal scratch']
  %s0 = inlined_call_operand.hbm [shape: bf16[2,768], index: 0, kind: input, shape index: {}]
  %s1 = inlined_call_operand.hbm [shape: bf16[768,128], index: 1, kind: input, shape index: {}]
  %s2 = inlined_call_operand.vmem [shape: f32[1,128], index: 2, kind: input, shape index: {}]
  %s3 = inlined_call_operand.hbm [shape: f32[2,128], index: 3, kind: output, shape index: {}]
  %s4 = sld [smem:[#allocation0]]
  $region30: #{tpu_custom_call.1} parent=0
    _
  %s6 = ssub.s32 1, %s4
  %s7 = scalar_select 0, %s6, %s4
  $region1: #{tpu_custom_call.1} parent=0
    #allocation2 [shape = 'u8[12288]{0}', space=vmem, size = 0x3000, scoped, tag = 'input window, operand 0, single buffered']
    #allocation3 [shape = 's32[1]{0}', space=sflag, size = 0x4, scoped, tag = 'scoped memory for tpu_custom_call.1']
    #allocation4 [shape = 's32[1]{0}', space=sflag, size = 0x4, scoped, tag = 'scoped memory for tpu_custom_call.1']
    #allocation5 [shape = 'u8[196608]{0}', space=vmem, size = 0x30000, scoped, tag = 'input window, operand 1, single buffered']
    #allocation6 [shape = 's32[1]{0}', space=sflag, size = 0x4, scoped, tag = 'scoped memory for tpu_custom_call.1']
    #allocation7 [shape = 'u8[4096]{0}', space=vmem, size = 0x1000, scoped, tag = 'output window, operand 0, single buffered']
    %8 = vsyncpa [#allocation3], 0
    %9 = vsyncpa [#allocation6], 0
    %10 = vsyncpa [#allocation4], 0
    // Predicated region
    $region2: #{tpu_custom_call.1} parent=1 // pred_check
      _
    $region3: #{tpu_custom_call.1} parent=1 // pred_check_branch
      %12 = sbr.rel (0) target = $region5
    $region4: #{tpu_custom_call.1} parent=1 // pred_region
      %s14 = ssub.s32 384, 96
      %15 = vsyncadd [#allocation3], %s14
      %s16 = sshll.u32 [#allocation2], 4
      %s17 = int_to_ptr.vmem [resolvable:$true] %s16
      %22 = dma.hbm_to_vmem [thread:$0]  %s0, 96, %s17, [#allocation3], 96, 96, 6
    $region5: #{tpu_custom_call.1} parent=1 // pred_fallthru
      _
    // Predicated region
    $region6: #{tpu_custom_call.1} parent=1 // pred_check
      _
    $region7: #{tpu_custom_call.1} parent=1 // pred_check_branch
      %24 = sbr.rel (0) target = $region9
    $region8: #{tpu_custom_call.1} parent=1 // pred_region
      %s26 = ssub.s32 6144, 6144
      %27 = vsyncadd [#allocation6], %s26
      %s28 = sshll.u32 [#allocation5], 4
      %s29 = int_to_ptr.vmem [resolvable:$true] %s28
      %34 = dma.hbm_to_vmem [thread:$0]  %s1, 6144, %s29, [#allocation6], 64, 64, 4
    $region9: #{tpu_custom_call.1} parent=1 // pred_fallthru
      _
    // Predicated region
    $region10: #{tpu_custom_call.1} parent=1 // pred_check
      _
    $region11: #{tpu_custom_call.1} parent=1 // pred_check_branch
      %36 = sbr.rel (0) target = $region13
    $region12: #{tpu_custom_call.1} parent=1 // pred_region
      _
    $region13: #{tpu_custom_call.1} parent=1 // pred_fallthru
      _
    // Predicated region
    $region14: #{tpu_custom_call.1} parent=1 // pred_check
      _
    $region15: #{tpu_custom_call.1} parent=1 // pred_check_branch
      %38 = sbr.rel (0) target = $region17
    $region16: #{tpu_custom_call.1} parent=1 // pred_region
      %39 = dma.done [#allocation3], 384
    $region17: #{tpu_custom_call.1} parent=1 // pred_fallthru
      _
    // Predicated region
    $region18: #{tpu_custom_call.1} parent=1 // pred_check
      _
    $region19: #{tpu_custom_call.1} parent=1 // pred_check_branch
      %41 = sbr.rel (0) target = $region21
    $region20: #{tpu_custom_call.1} parent=1 // pred_region
      %42 = dma.done [#allocation6], 6144
    $region21: #{tpu_custom_call.1} parent=1 // pred_fallthru
      _
    %v44 = vld [vmem:[#allocation2] sm:$0x3f]
    %v45 = vld [vmem:[#allocation2 + $0x6] sm:$0x3f]
    %v46 = vld [vmem:[#allocation2 + $0xc] sm:$0x3f]
    %v47 = vld [vmem:[#allocation2 + $0x12] sm:$0x3f]
    %v48 = vld [vmem:[#allocation5] sm:$0xf]
    %v49 = vld [vmem:[#allocation5 + $0x4] sm:$0xf]
    %v50 = vld [vmem:[#allocation5 + $0x8] sm:$0xf]
    %v51 = vld [vmem:[#allocation5 + $0xc] sm:$0xf]
    %v52 = vld [vmem:[#allocation5 + $0x10] sm:$0xf]
    %v53 = vld [vmem:[#allocation5 + $0x14] sm:$0xf]
    %v54 = vld [vmem:[#allocation5 + $0x18] sm:$0xf]
    %v55 = vld [vmem:[#allocation5 + $0x1c] sm:$0xf]
    %v56 = vld [vmem:[#allocation5 + $0x20] sm:$0xf]
    %v57 = vld [vmem:[#allocation5 + $0x24] sm:$0xf]
    %v58 = vld [vmem:[#allocation5 + $0x28] sm:$0xf]
    %v59 = vld [vmem:[#allocation5 + $0x2c] sm:$0xf]
    %v60 = vld [vmem:[#allocation5 + $0x30] sm:$0xf]
    %v61 = vld [vmem:[#allocation5 + $0x34] sm:$0xf]
    %v62 = vld [vmem:[#allocation5 + $0x38] sm:$0xf]
    %v63 = vld [vmem:[#allocation5 + $0x3c] sm:$0xf]
    %v64 = vld [vmem:[#allocation5 + $0x40] sm:$0xf]
    %v65 = vld [vmem:[#allocation5 + $0x44] sm:$0xf]
    %v66 = vld [vmem:[#allocation5 + $0x48] sm:$0xf]
    %v67 = vld [vmem:[#allocation5 + $0x4c] sm:$0xf]
    %v68 = vld [vmem:[#allocation5 + $0x50] sm:$0xf]
    %v69 = vld [vmem:[#allocation5 + $0x54] sm:$0xf]
    %v70 = vld [vmem:[#allocation5 + $0x58] sm:$0xf]
    %v71 = vld [vmem:[#allocation5 + $0x5c] sm:$0xf]
    %v72 = vld [vmem:[#allocation5 + $0x60] sm:$0xf]
    %v73 = vld [vmem:[#allocation5 + $0x64] sm:$0xf]
    %v74 = vld [vmem:[#allocation5 + $0x68] sm:$0xf]
    %v75 = vld [vmem:[#allocation5 + $0x6c] sm:$0xf]
    %v76 = vld [vmem:[#allocation5 + $0x70] sm:$0xf]
    %v77 = vld [vmem:[#allocation5 + $0x74] sm:$0xf]
    %v78 = vld [vmem:[#allocation5 + $0x78] sm:$0xf]
    %v79 = vld [vmem:[#allocation5 + $0x7c] sm:$0xf]
    %v80 = vld [vmem:[#allocation5 + $0x80] sm:$0xf]
    %v81 = vld [vmem:[#allocation5 + $0x84] sm:$0xf]
    %v82 = vld [vmem:[#allocation5 + $0x88] sm:$0xf]
    %v83 = vld [vmem:[#allocation5 + $0x8c] sm:$0xf]
    %v84 = vld [vmem:[#allocation5 + $0x90] sm:$0xf]
    %v85 = vld [vmem:[#allocation5 + $0x94] sm:$0xf]
    %v86 = vld [vmem:[#allocation5 + $0x98] sm:$0xf]
    %v87 = vld [vmem:[#allocation5 + $0x9c] sm:$0xf]
    %v88 = vld [vmem:[#allocation5 + $0xa0] sm:$0xf]
    %v89 = vld [vmem:[#allocation5 + $0xa4] sm:$0xf]
    %v90 = vld [vmem:[#allocation5 + $0xa8] sm:$0xf]
    %v91 = vld [vmem:[#allocation5 + $0xac] sm:$0xf]
    %v92 = vld [vmem:[#allocation5 + $0xb0] sm:$0xf]
    %v93 = vld [vmem:[#allocation5 + $0xb4] sm:$0xf]
    %v94 = vld [vmem:[#allocation5 + $0xb8] sm:$0xf]
    %v95 = vld [vmem:[#allocation5 + $0xbc] sm:$0xf]
    %v96 = vld [vmem:[#allocation5 + $0xc0] sm:$0xf]
    %v97 = vld [vmem:[#allocation5 + $0xc4] sm:$0xf]
    %v98 = vld [vmem:[#allocation5 + $0xc8] sm:$0xf]
    %v99 = vld [vmem:[#allocation5 + $0xcc] sm:$0xf]
    %v100 = vld [vmem:[#allocation5 + $0xd0] sm:$0xf]
    %v101 = vld [vmem:[#allocation5 + $0xd4] sm:$0xf]
    %v102 = vld [vmem:[#allocation5 + $0xd8] sm:$0xf]
    %v103 = vld [vmem:[#allocation5 + $0xdc] sm:$0xf]
    %v104 = vld [vmem:[#allocation5 + $0xe0] sm:$0xf]
    %v105 = vld [vmem:[#allocation5 + $0xe4] sm:$0xf]
    %v106 = vld [vmem:[#allocation5 + $0xe8] sm:$0xf]
    %v107 = vld [vmem:[#allocation5 + $0xec] sm:$0xf]
    %v108 = vld [vmem:[#allocation5 + $0xf0] sm:$0xf]
    %v109 = vld [vmem:[#allocation5 + $0xf4] sm:$0xf]
    %v110 = vld [vmem:[#allocation5 + $0xf8] sm:$0xf]
    %v111 = vld [vmem:[#allocation5 + $0xfc] sm:$0xf]
    %v112 = vld [vmem:[#allocation5 + $0x100] sm:$0xf]
    %v113 = vld [vmem:[#allocation5 + $0x104] sm:$0xf]
    %v114 = vld [vmem:[#allocation5 + $0x108] sm:$0xf]
    %v115 = vld [vmem:[#allocation5 + $0x10c] sm:$0xf]
    %v116 = vld [vmem:[#allocation5 + $0x110] sm:$0xf]
    %v117 = vld [vmem:[#allocation5 + $0x114] sm:$0xf]
    %v118 = vld [vmem:[#allocation5 + $0x118] sm:$0xf]
    %v119 = vld [vmem:[#allocation5 + $0x11c] sm:$0xf]
    %v120 = vld [vmem:[#allocation5 + $0x120] sm:$0xf]
    %v121 = vld [vmem:[#allocation5 + $0x124] sm:$0xf]
    %v122 = vld [vmem:[#allocation5 + $0x128] sm:$0xf]
    %v123 = vld [vmem:[#allocation5 + $0x12c] sm:$0xf]
    %v124 = vld [vmem:[#allocation5 + $0x130] sm:$0xf]
    %v125 = vld [vmem:[#allocation5 + $0x134] sm:$0xf]
    %v126 = vld [vmem:[#allocation5 + $0x138] sm:$0xf]
    %v127 = vld [vmem:[#allocation5 + $0x13c] sm:$0xf]
    %v128 = vld [vmem:[#allocation5 + $0x140] sm:$0xf]
    %v129 = vld [vmem:[#allocation5 + $0x144] sm:$0xf]
    %v130 = vld [vmem:[#allocation5 + $0x148] sm:$0xf]
    %v131 = vld [vmem:[#allocation5 + $0x14c] sm:$0xf]
    %v132 = vld [vmem:[#allocation5 + $0x150] sm:$0xf]
    %v133 = vld [vmem:[#allocation5 + $0x154] sm:$0xf]
    %v134 = vld [vmem:[#allocation5 + $0x158] sm:$0xf]
    %v135 = vld [vmem:[#allocation5 + $0x15c] sm:$0xf]
    %v136 = vld [vmem:[#allocation5 + $0x160] sm:$0xf]
    %v137 = vld [vmem:[#allocation5 + $0x164] sm:$0xf]
    %v138 = vld [vmem:[#allocation5 + $0x168] sm:$0xf]
    %v139 = vld [vmem:[#allocation5 + $0x16c] sm:$0xf]
    %v140 = vld [vmem:[#allocation5 + $0x170] sm:$0xf]
    %v141 = vld [vmem:[#allocation5 + $0x174] sm:$0xf]
    %v142 = vld [vmem:[#allocation5 + $0x178] sm:$0xf]
    %v143 = vld [vmem:[#allocation5 + $0x17c] sm:$0xf]
    %v144 = vld [vmem:[%s2] sm:$0x1]
    %v146 = vlaneseq
    %v147 = vshrl.u32 %v146, 7
    %v148 = vsub.s32 0, %v147
    %v149 = vrot.slane %v144, %v148
    %v155 = vcombine.low %v44, %v45
    %v156 = vcombine.high %v44, %v45
    %v157 = vcombine.low %v46, %v47
    %v158 = vcombine.high %v46, %v47
    %v160 = vunpack.c.l.s4 1966171168
    %v161 = vunpack.c.0.s8 %v160
    %v162 = vlaneseq
    %v163 = vshrl.u32 %v162, 7
    %v164 = vsub.s32 %v161, %v163
    %v165 = vrot.slane %v155, %v164
    %v167 = vunpack.c.l.s4 1966171168
    %v168 = vunpack.c.0.s8 %v167
    %v169 = vlaneseq
    %v170 = vshrl.u32 %v169, 7
    %v171 = vsub.s32 %v168, %v170
    %v172 = vrot.slane %v156, %v171
    %v174 = vunpack.c.l.s4 1966171168
    %v175 = vunpack.c.0.s8 %v174
    %v176 = vlaneseq
    %v177 = vshrl.u32 %v176, 7
    %v178 = vsub.s32 %v175, %v177
    %v179 = vrot.slane %v157, %v178
    %v181 = vunpack.c.l.s4 1966171168
    %v182 = vunpack.c.0.s8 %v181
    %v183 = vlaneseq
    %v184 = vshrl.u32 %v183, 7
    %v185 = vsub.s32 %v182, %v184
    %v186 = vrot.slane %v158, %v185
    %v187 = vcombine.low %v165, %v179
    %v188 = vcombine.high %v165, %v179
    %v189 = vcombine.low %v172, %v186
    %v190 = vcombine.high %v172, %v186
    %v192 = vunpack.c.l.s4 1966171168
    %v193 = vunpack.c.0.s8 %v192
    %v194 = vlaneseq
    %v195 = vshrl.u32 %v194, 7
    %v196 = vsub.s32 %v193, %v195
    %v197 = vrot.slane %v187, %v196
    %v199 = vunpack.c.l.s4 1966171168
    %v200 = vunpack.c.0.s8 %v199
    %v201 = vlaneseq
    %v202 = vshrl.u32 %v201, 7
    %v203 = vsub.s32 %v200, %v202
    %v204 = vrot.slane %v189, %v203
    %v206 = vunpack.c.l.s4 1966171168
    %v207 = vunpack.c.0.s8 %v206
    %v208 = vlaneseq
    %v209 = vshrl.u32 %v208, 7
    %v210 = vsub.s32 %v207, %v209
    %v211 = vrot.slane %v188, %v210
    %v213 = vunpack.c.l.s4 1966171168
    %v214 = vunpack.c.0.s8 %v213
    %v215 = vlaneseq
    %v216 = vshrl.u32 %v215, 7
    %v217 = vsub.s32 %v214, %v216
    %v218 = vrot.slane %v190, %v217
    %v219 = vcombine.high %v197, %v197
    %v220 = vcombine.high %v211, %v211
    %v323 = vunpack.c.l.b16 %v48
    %v324 = vunpack.c.l.b16 %v49
    %v325 = vunpack.c.l.b16 %v50
    %v326 = vunpack.c.l.b16 %v51
    %v327 = vunpack.c.l.b16 %v52
    %v328 = vunpack.c.l.b16 %v53
    %v329 = vunpack.c.l.b16 %v54
    %v330 = vunpack.c.l.b16 %v55
    %v331 = vunpack.c.l.b16 %v56
    %v332 = vunpack.c.l.b16 %v57
    %v333 = vunpack.c.l.b16 %v58
    %v334 = vunpack.c.l.b16 %v59
    %v335 = vunpack.c.l.b16 %v60
    %v336 = vunpack.c.l.b16 %v61
    %v337 = vunpack.c.l.b16 %v62
    %v338 = vunpack.c.l.b16 %v63
    %v339 = vunpack.c.l.b16 %v64
    %v340 = vunpack.c.l.b16 %v65
    %v341 = vunpack.c.l.b16 %v66
    %v342 = vunpack.c.l.b16 %v67
    %v343 = vunpack.c.l.b16 %v68
    %v344 = vunpack.c.l.b16 %v69
    %v345 = vunpack.c.l.b16 %v70
    %v346 = vunpack.c.l.b16 %v71
    %v347 = vunpack.c.l.b16 %v72
    %v348 = vunpack.c.l.b16 %v73
    %v349 = vunpack.c.l.b16 %v74
    %v350 = vunpack.c.l.b16 %v75
    %v351 = vunpack.c.l.b16 %v76
    %v352 = vunpack.c.l.b16 %v77
    %v353 = vunpack.c.l.b16 %v78
    %v354 = vunpack.c.l.b16 %v79
    %v355 = vunpack.c.l.b16 %v80
    %v356 = vunpack.c.l.b16 %v81
    %v357 = vunpack.c.l.b16 %v82
    %v358 = vunpack.c.l.b16 %v83
    %v359 = vunpack.c.l.b16 %v84
    %v360 = vunpack.c.l.b16 %v85
    %v361 = vunpack.c.l.b16 %v86
    %v362 = vunpack.c.l.b16 %v87
    %v363 = vunpack.c.l.b16 %v88
    %v364 = vunpack.c.l.b16 %v89
    %v365 = vunpack.c.l.b16 %v90
    %v366 = vunpack.c.l.b16 %v91
    %v367 = vunpack.c.l.b16 %v92
    %v368 = vunpack.c.l.b16 %v93
    %v369 = vunpack.c.l.b16 %v94
    %v370 = vunpack.c.l.b16 %v95
    %v371 = vunpack.c.l.b16 %v96
    %v372 = vunpack.c.l.b16 %v97
    %v373 = vunpack.c.l.b16 %v98
    %v374 = vunpack.c.l.b16 %v99
    %v375 = vunpack.c.l.b16 %v100
    %v376 = vunpack.c.l.b16 %v101
    %v377 = vunpack.c.l.b16 %v102
    %v378 = vunpack.c.l.b16 %v103
    %v379 = vunpack.c.l.b16 %v104
    %v380 = vunpack.c.l.b16 %v105
    %v381 = vunpack.c.l.b16 %v106
    %v382 = vunpack.c.l.b16 %v107
    %v383 = vunpack.c.l.b16 %v108
    %v384 = vunpack.c.l.b16 %v109
    %v385 = vunpack.c.l.b16 %v110
    %v386 = vunpack.c.l.b16 %v111
    %v387 = vunpack.c.l.b16 %v112
    %v388 = vunpack.c.l.b16 %v113
    %v389 = vunpack.c.l.b16 %v114
    %v390 = vunpack.c.l.b16 %v115
    %v391 = vunpack.c.l.b16 %v116
    %v392 = vunpack.c.l.b16 %v117
    %v393 = vunpack.c.l.b16 %v118
    %v394 = vunpack.c.l.b16 %v119
    %v395 = vunpack.c.l.b16 %v120
    %v396 = vunpack.c.l.b16 %v121
    %v397 = vunpack.c.l.b16 %v122
    %v398 = vunpack.c.l.b16 %v123
    %v399 = vunpack.c.l.b16 %v124
    %v400 = vunpack.c.l.b16 %v125
    %v401 = vunpack.c.l.b16 %v126
    %v402 = vunpack.c.l.b16 %v127
    %v403 = vunpack.c.l.b16 %v128
    %v404 = vunpack.c.l.b16 %v129
    %v405 = vunpack.c.l.b16 %v130
    %v406 = vunpack.c.l.b16 %v131
    %v407 = vunpack.c.l.b16 %v132
    %v408 = vunpack.c.l.b16 %v133
    %v409 = vunpack.c.l.b16 %v134
    %v410 = vunpack.c.l.b16 %v135
    %v411 = vunpack.c.l.b16 %v136
    %v412 = vunpack.c.l.b16 %v137
    %v413 = vunpack.c.l.b16 %v138
    %v414 = vunpack.c.l.b16 %v139
    %v415 = vunpack.c.l.b16 %v140
    %v416 = vunpack.c.l.b16 %v141
    %v417 = vunpack.c.l.b16 %v142
    %v418 = vunpack.c.l.b16 %v143
    %v419 = vpack.c.b16 %v324, %v323
    %v420 = vpack.c.b16 %v326, %v325
    %v421 = vpack.c.b16 %v328, %v327
    %v422 = vpack.c.b16 %v330, %v329
    %v423 = vpack.c.b16 %v332, %v331
    %v424 = vpack.c.b16 %v334, %v333
    %v425 = vpack.c.b16 %v336, %v335
    %v426 = vpack.c.b16 %v338, %v337
    %v427 = vpack.c.b16 %v340, %v339
    %v428 = vpack.c.b16 %v342, %v341
    %v429 = vpack.c.b16 %v344, %v343
    %v430 = vpack.c.b16 %v346, %v345
    %v431 = vpack.c.b16 %v348, %v347
    %v432 = vpack.c.b16 %v350, %v349
    %v433 = vpack.c.b16 %v352, %v351
    %v434 = vpack.c.b16 %v354, %v353
    %v435 = vpack.c.b16 %v356, %v355
    %v436 = vpack.c.b16 %v358, %v357
    %v437 = vpack.c.b16 %v360, %v359
    %v438 = vpack.c.b16 %v362, %v361
    %v439 = vpack.c.b16 %v364, %v363
    %v440 = vpack.c.b16 %v366, %v365
    %v441 = vpack.c.b16 %v368, %v367
    %v442 = vpack.c.b16 %v370, %v369
    %v443 = vpack.c.b16 %v372, %v371
    %v444 = vpack.c.b16 %v374, %v373
    %v445 = vpack.c.b16 %v376, %v375
    %v446 = vpack.c.b16 %v378, %v377
    %v447 = vpack.c.b16 %v380, %v379
    %v448 = vpack.c.b16 %v382, %v381
    %v449 = vpack.c.b16 %v384, %v383
    %v450 = vpack.c.b16 %v386, %v385
    %v451 = vpack.c.b16 %v388, %v387
    %v452 = vpack.c.b16 %v390, %v389
    %v453 = vpack.c.b16 %v392, %v391
    %v454 = vpack.c.b16 %v394, %v393
    %v455 = vpack.c.b16 %v396, %v395
    %v456 = vpack.c.b16 %v398, %v397
    %v457 = vpack.c.b16 %v400, %v399
    %v458 = vpack.c.b16 %v402, %v401
    %v459 = vpack.c.b16 %v404, %v403
    %v460 = vpack.c.b16 %v406, %v405
    %v461 = vpack.c.b16 %v408, %v407
    %v462 = vpack.c.b16 %v410, %v409
    %v463 = vpack.c.b16 %v412, %v411
    %v464 = vpack.c.b16 %v414, %v413
    %v465 = vpack.c.b16 %v416, %v415
    %v466 = vpack.c.b16 %v418, %v417
    %515 = vmatprep.subr.bf16.mxu0 0
    %516 = vmatpush1.bf16.msra.mxu0 %v426
    %517 = vmatprep.subr.bf16.mxu0 0
    %518 = vmatpush1.bf16.msra.mxu0 %v425
    %519 = vmatprep.subr.bf16.mxu0 0
    %520 = vmatpush1.bf16.msra.mxu0 %v424
    %521 = vmatprep.subr.bf16.mxu0 0
    %522 = vmatpush1.bf16.msra.mxu0 %v423
    %523 = vmatprep.subr.bf16.mxu0 0
    %524 = vmatpush1.bf16.msra.mxu0 %v422
    %525 = vmatprep.subr.bf16.mxu0 0
    %526 = vmatpush1.bf16.msra.mxu0 %v421
    %527 = vmatprep.subr.bf16.mxu0 0
    %528 = vmatpush1.bf16.msra.mxu0 %v420
    %529 = vmatprep.subr.bf16.mxu0 0
    %530 = vmatpush1.bf16.msra.mxu0 %v419
    %531 = vmatprep.subr.bf16.mxu0 0
    %532 = vmatpush2.bf16.msra.mxu0 %v434
    %533 = vmatprep.subr.bf16.mxu0 0
    %534 = vmatpush2.bf16.msra.mxu0 %v433
    %535 = vmatprep.subr.bf16.mxu0 0
    %536 = vmatpush2.bf16.msra.mxu0 %v432
    %537 = vmatprep.subr.bf16.mxu0 0
    %538 = vmatpush2.bf16.msra.mxu0 %v431
    %539 = vmatprep.subr.bf16.mxu0 0
    %540 = vmatpush2.bf16.msra.mxu0 %v430
    %541 = vmatprep.subr.bf16.mxu0 0
    %542 = vmatpush2.bf16.msra.mxu0 %v429
    %543 = vmatprep.subr.bf16.mxu0 0
    %544 = vmatpush2.bf16.msra.mxu0 %v428
    %545 = vmatprep.subr.bf16.mxu0 0
    %546 = vmatpush2.bf16.msra.mxu0 %v427
    %547 = vmatprep.mubr.bf16.mxu0 %v211
    %548 = vmatmul.mubr.bf16.gmra.mxu0 %v197
    %v549 = vpop.f32.mrf.mxu0
    %v550 = vadd.f32 %v149, %v549
    %v551 = vpop.f32.mrf.mxu0
    %v552 = vpop.f32.mrf.mxu0
    %v553 = vpop.f32.mrf.mxu0
    %554 = vdwg.mxu0
    %555 = vmatprep.subr.bf16.mxu0 0
    %556 = vmatpush1.bf16.msra.mxu0 %v442
    %557 = vmatprep.subr.bf16.mxu0 0
    %558 = vmatpush1.bf16.msra.mxu0 %v441
    %559 = vmatprep.subr.bf16.mxu0 0
    %560 = vmatpush1.bf16.msra.mxu0 %v440
    %561 = vmatprep.subr.bf16.mxu0 0
    %562 = vmatpush1.bf16.msra.mxu0 %v439
    %563 = vmatprep.subr.bf16.mxu0 0
    %564 = vmatpush1.bf16.msra.mxu0 %v438
    %565 = vmatprep.subr.bf16.mxu0 0
    %566 = vmatpush1.bf16.msra.mxu0 %v437
    %567 = vmatprep.subr.bf16.mxu0 0
    %568 = vmatpush1.bf16.msra.mxu0 %v436
    %569 = vmatprep.subr.bf16.mxu0 0
    %570 = vmatpush1.bf16.msra.mxu0 %v435
    %571 = vmatprep.subr.bf16.mxu0 0
    %572 = vmatpush2.bf16.msra.mxu0 %v450
    %573 = vmatprep.subr.bf16.mxu0 0
    %574 = vmatpush2.bf16.msra.mxu0 %v449
    %575 = vmatprep.subr.bf16.mxu0 0
    %576 = vmatpush2.bf16.msra.mxu0 %v448
    %577 = vmatprep.subr.bf16.mxu0 0
    %578 = vmatpush2.bf16.msra.mxu0 %v447
    %579 = vmatprep.subr.bf16.mxu0 0
    %580 = vmatpush2.bf16.msra.mxu0 %v446
    %581 = vmatprep.subr.bf16.mxu0 0
    %582 = vmatpush2.bf16.msra.mxu0 %v445
    %583 = vmatprep.subr.bf16.mxu0 0
    %584 = vmatpush2.bf16.msra.mxu0 %v444
    %585 = vmatprep.subr.bf16.mxu0 0
    %586 = vmatpush2.bf16.msra.mxu0 %v443
    %587 = vmatprep.mubr.bf16.mxu0 %v220
    %588 = vmatmul.mubr.bf16.gmra.mxu0 %v219
    %v589 = vpop.f32.mrf.mxu0
    %v590 = vadd.f32 %v550, %v589
    %v591 = vpop.f32.mrf.mxu0
    %v592 = vpop.f32.mrf.mxu0
    %v593 = vpop.f32.mrf.mxu0
    %594 = vdwg.mxu0
    %595 = vmatprep.subr.bf16.mxu0 0
    %596 = vmatpush1.bf16.msra.mxu0 %v458
    %597 = vmatprep.subr.bf16.mxu0 0
    %598 = vmatpush1.bf16.msra.mxu0 %v457
    %599 = vmatprep.subr.bf16.mxu0 0
    %600 = vmatpush1.bf16.msra.mxu0 %v456
    %601 = vmatprep.subr.bf16.mxu0 0
    %602 = vmatpush1.bf16.msra.mxu0 %v455
    %603 = vmatprep.subr.bf16.mxu0 0
    %604 = vmatpush1.bf16.msra.mxu0 %v454
    %605 = vmatprep.subr.bf16.mxu0 0
    %606 = vmatpush1.bf16.msra.mxu0 %v453
    %607 = vmatprep.subr.bf16.mxu0 0
    %608 = vmatpush1.bf16.msra.mxu0 %v452
    %609 = vmatprep.subr.bf16.mxu0 0
    %610 = vmatpush1.bf16.msra.mxu0 %v451
    %611 = vmatprep.subr.bf16.mxu0 0
    %612 = vmatpush2.bf16.msra.mxu0 %v466
    %613 = vmatprep.subr.bf16.mxu0 0
    %614 = vmatpush2.bf16.msra.mxu0 %v465
    %615 = vmatprep.subr.bf16.mxu0 0
    %616 = vmatpush2.bf16.msra.mxu0 %v464
    %617 = vmatprep.subr.bf16.mxu0 0
    %618 = vmatpush2.bf16.msra.mxu0 %v463
    %619 = vmatprep.subr.bf16.mxu0 0
    %620 = vmatpush2.bf16.msra.mxu0 %v462
    %621 = vmatprep.subr.bf16.mxu0 0
    %622 = vmatpush2.bf16.msra.mxu0 %v461
    %623 = vmatprep.subr.bf16.mxu0 0
    %624 = vmatpush2.bf16.msra.mxu0 %v460
    %625 = vmatprep.subr.bf16.mxu0 0
    %626 = vmatpush2.bf16.msra.mxu0 %v459
    %627 = vmatprep.mubr.bf16.mxu0 %v218
    %628 = vmatmul.mubr.bf16.gmra.mxu0 %v204
    %v629 = vpop.f32.mrf.mxu0
    %v630 = vadd.f32 %v590, %v629
    %v631 = vpop.f32.mrf.mxu0
    %v632 = vpop.f32.mrf.mxu0
    %v633 = vpop.f32.mrf.mxu0
    %634 = vdwg.mxu0
    %635 = vst [vmem:[#allocation7] sm:$0xff] %v630
    // Predicated region
    $region22: #{tpu_custom_call.1} parent=1 // pred_check
      _
    $region23: #{tpu_custom_call.1} parent=1 // pred_check_branch
      %637 = sbr.rel (0) target = $region25
    $region24: #{tpu_custom_call.1} parent=1 // pred_region
      %s639 = ssub.s32 128, 32
      %640 = vsyncadd [#allocation4], %s639
      %s641 = sshll.u32 [#allocation7], 4
      %s642 = int_to_ptr.vmem [resolvable:$true] %s641
      %647 = dma.vmem_to_hbm [thread:$0]  %s642, 32, %s3, [#allocation4], 32, 32, 2
    $region25: #{tpu_custom_call.1} parent=1 // pred_fallthru
      _
    // Predicated region
    $region26: #{tpu_custom_call.1} parent=1 // pred_check
      _
    $region27: #{tpu_custom_call.1} parent=1 // pred_check_branch
      %649 = sbr.rel (0) target = $region29
    $region28: #{tpu_custom_call.1} parent=1 // pred_region
      %650 = dma.done [#allocation4], 128
    $region29: #{tpu_custom_call.1} parent=1 // pred_fallthru
      _
    %651 = vsyncpa [#allocation3], 1
    %652 = vsyncpa [#allocation6], 1
    %653 = vsyncpa [#allocation4], 1

</llo_original>
